<compile_context>
chip_gen: v7x
topology: tpu7x:2x2x1
jax: 0.10.0
libtpu: 0.0.40
codegen_flags: <defaults>
</compile_context>

<pallas_src>
import jax
import jax.numpy as jnp
from jax.experimental import pallas as pl
from jax.experimental.pallas import tpu as pltpu


def _largest_aligned_divisor(n, cap, align):
    """Largest divisor of `n` that is a multiple of `align` and <= cap.

    Falls back to `n` itself (use the full dimension) if no such divisor
    exists.  Used to pick tile sizes that satisfy the (8, 128) constraint and
    the VMEM budget.
    """
    if n <= cap:
        return n
    t = (cap // align) * align
    while t >= align:
        if n % t == 0:
            return t
        t -= align
    return n


# ---------------------------------------------------------------------------
# Kernel 1: proj = SiLU(emb) @ W + b, written as (6, B, D)
# ---------------------------------------------------------------------------
def silu_linear_kernel(emb_ref, w_ref, b_ref, out_ref, acc_ref):
    k = pl.program_id(2)

    @pl.when(k == 0)
    def _():
        acc_ref[...] = jnp.zeros_like(acc_ref)

    x = emb_ref[...].astype(jnp.float32)          # (B, TK)
    s = x * jax.nn.sigmoid(x)                     # SiLU on VPU/EUP
    # Feed the MXU in the weight's dtype (bf16 weights -> bf16 MXU path and
    # half the W HBM traffic); accumulate in f32.
    acc_ref[...] += jnp.dot(s.astype(w_ref.dtype), w_ref[...],
                            preferred_element_type=jnp.float32)

    @pl.when(k == pl.num_programs(2) - 1)
    def _():
        y = acc_ref[...] + b_ref[...].astype(jnp.float32)   # (B, TN)
        out_ref[...] = y[None, :, :].astype(out_ref.dtype)


def silu_linear(emb, w, b, *, block_n=512, block_k=512, out_dtype=None):
    """Returns proj of shape (6, B, D): proj[c] = SiLU(emb) @ W_c + b_c."""
    B, D = emb.shape
    assert w.shape == (D, 6 * D), w.shape
    assert b.shape == (1, 6 * D), b.shape
    out_dtype = out_dtype or emb.dtype

    tn = _largest_aligned_divisor(D, block_n, 128)   # column tile within a chunk
    tk = _largest_aligned_divisor(D, block_k, 128)   # contraction tile
    n_col_blocks = D // tn

    grid = (6, n_col_blocks, D // tk)

    return pl.pallas_call(
        silu_linear_kernel,
        out_shape=jax.ShapeDtypeStruct((6, B, D), out_dtype),
        grid_spec=pltpu.PrefetchScalarGridSpec(
            num_scalar_prefetch=0,
            grid=grid,
            in_specs=[
                # emb: small, re-fetched per contraction step (cheap).
                pl.BlockSpec((B, tk), lambda j, n, k: (0, k)),
                # W: streamed (TK, TN) tiles; column offset = chunk j + tile n.
                pl.BlockSpec((tk, tn),
                             lambda j, n, k: (k, j * n_col_blocks + n)),
                # bias: (1, TN) tile per output column block.
                pl.BlockSpec((1, tn),
                             lambda j, n, k: (0, j * n_col_blocks + n)),
            ],
            out_specs=pl.BlockSpec((1, B, tn), lambda j, n, k: (j, 0, n)),
            scratch_shapes=[pltpu.VMEM((B, tn), jnp.float32)],
        ),
        compiler_params=pltpu.CompilerParams(
            dimension_semantics=("parallel", "parallel", "arbitrary"),
            vmem_limit_bytes=48 * 1024 * 1024,
        ),
    )(emb, w, b)


# ---------------------------------------------------------------------------
# Kernel 2: out = LayerNorm(h) * (1 + scale[:, None, :]) + shift[:, None, :]
# LayerNorm over last dim, eps=1e-6, no elementwise affine (matches PyTorch).
# ---------------------------------------------------------------------------
def adaln_mod_kernel(shift_ref, scale_ref, h_ref, out_ref):
    bidx = pl.program_id(0)

    h = h_ref[...].astype(jnp.float32)             # (1, TS, D)
    mean = jnp.mean(h, axis=-1, keepdims=True)
    centered = h - mean
    var = jnp.mean(centered * centered, axis=-1, keepdims=True)  # biased var
    normed = centered * jax.lax.rsqrt(var + 1e-6)

    # shift/scale are fully VMEM-resident (constant index_map -> DMA'd once);
    # pick out this batch row and hoist the (1 + scale) add.
    scale1 = 1.0 + scale_ref[pl.ds(bidx, 1), :].astype(jnp.float32)  # (1, D)
    shift = shift_ref[pl.ds(bidx, 1), :].astype(jnp.float32)         # (1, D)

    out_ref[...] = (normed * scale1[:, None, :]
                    + shift[:, None, :]).astype(out_ref.dtype)


def adaln_modulate(hidden, shift_msa, scale_msa, *, block_bytes=4 << 20):
    B, S, D = hidden.shape
    itemsize = jnp.dtype(hidden.dtype).itemsize
    cap = max(1, block_bytes // max(1, D * itemsize))
    ts = _largest_aligned_divisor(S, cap, 8)       # rows per tile (mult of 8)

    return pl.pallas_call(
        adaln_mod_kernel,
        out_shape=jax.ShapeDtypeStruct((B, S, D), hidden.dtype),
        grid_spec=pltpu.PrefetchScalarGridSpec(
            num_scalar_prefetch=0,
            grid=(B, S // ts),
            in_specs=[
                pl.BlockSpec((B, D), lambda b, s: (0, 0)),       # shift (resident)
                pl.BlockSpec((B, D), lambda b, s: (0, 0)),       # scale (resident)
                pl.BlockSpec((1, ts, D), lambda b, s: (b, s, 0)),  # hidden tile
            ],
            out_specs=pl.BlockSpec((1, ts, D), lambda b, s: (b, s, 0)),
        ),
        compiler_params=pltpu.CompilerParams(
            dimension_semantics=("parallel", "parallel"),
            vmem_limit_bytes=48 * 1024 * 1024,
        ),
    )(shift_msa, scale_msa, hidden)


# ---------------------------------------------------------------------------
# Module-level forward (glue in plain JAX)
# ---------------------------------------------------------------------------
def ada_layer_norm_zero(hidden_states, emb, w, b):
    """Equivalent of AdaLayerNormZero.forward.

    hidden_states: (B, S, D)
    emb:           (B, D)
    w:             (D, 6*D)   (transposed PyTorch nn.Linear weight)
    b:             (1, 6*D)
    returns (modulated_hidden, gate_msa, shift_mlp, scale_mlp, gate_mlp)
    """
    proj = silu_linear(emb, w, b)          # (6, B, D): leading-axis chunks
    shift_msa = proj[0]
    scale_msa = proj[1]
    gate_msa = proj[2]
    shift_mlp = proj[3]
    scale_mlp = proj[4]
    gate_mlp = proj[5]
    out = adaln_modulate(hidden_states, shift_msa, scale_msa)
    return out, gate_msa, shift_mlp, scale_mlp, gate_mlp


# ---------------------------------------------------------------------------
# Pure-JAX reference for correctness checking
# ---------------------------------------------------------------------------
def ada_layer_norm_zero_ref(hidden_states, emb, w, b):
    s = emb * jax.nn.sigmoid(emb)
    proj = jnp.dot(s, w, precision=jax.lax.Precision.HIGHEST) + b[0]
    D = emb.shape[-1]
    shift_msa, scale_msa, gate_msa, shift_mlp, scale_mlp, gate_mlp = (
        proj[:, i * D:(i + 1) * D] for i in range(6))
    mean = jnp.mean(hidden_states, axis=-1, keepdims=True)
    var = jnp.mean((hidden_states - mean) ** 2, axis=-1, keepdims=True)
    normed = (hidden_states - mean) / jnp.sqrt(var + 1e-6)
    out = normed * (1.0 + scale_msa[:, None, :]) + shift_msa[:, None, :]
    return out, gate_msa, shift_mlp, scale_mlp, gate_mlp


if __name__ == "__main__":
    # Small shapes consistent with the module; D is a multiple of 128 so the
    # tiled BlockSpecs satisfy the lane constraint.
    B, S, D = 2, 8, 128

    key = jax.random.PRNGKey(0)
    k1, k2, k3, k4 = jax.random.split(key, 4)

    hidden = jax.random.normal(k1, (B, S, D), dtype=jnp.float32)
    emb = jax.random.normal(k2, (B, D), dtype=jnp.float32)

    # Deterministic "Linear(embedding_dim, 6*embedding_dim, bias=True)" params.
    w = jax.random.normal(k3, (D, 6 * D), dtype=jnp.float32) / jnp.sqrt(D)
    b = jax.random.normal(k4, (1, 6 * D), dtype=jnp.float32) * 0.01

    outs = ada_layer_norm_zero(hidden, emb, w, b)
    outs = jax.block_until_ready(outs)

    refs = ada_layer_norm_zero_ref(hidden, emb, w, b)
    for o, r in zip(outs, refs):
        assert o.shape == r.shape, (o.shape, r.shape)
        err = jnp.max(jnp.abs(o.astype(jnp.float32) - r.astype(jnp.float32)))
        assert err < 2e-3, err

    print("KERNEL_OK")
</pallas_src>

<mosaic_0001>
module attributes {stable_mosaic.version = 11 : i64} {
  func.func @silu_linear_kernel(%arg0: i32, %arg1: i32, %arg2: i32, %arg3: memref<2x128xf32, #tpu.memory_space<vmem>>, %arg4: memref<128x128xf32, #tpu.memory_space<vmem>>, %arg5: memref<1x128xf32, #tpu.memory_space<vmem>>, %arg6: memref<1x2x128xf32, #tpu.memory_space<vmem>>, %arg7: memref<2x128xf32, #tpu.memory_space<vmem>>) attributes {dimension_semantics = [#tpu.dimension_semantics<parallel>, #tpu.dimension_semantics<parallel>, #tpu.dimension_semantics<arbitrary>], iteration_bounds = array<i64: 6, 1, 1>, scalar_prefetch = 0 : i64, scratch_operands = 1 : i64, tpu.core_type = #tpu.core_type<tc>, window_params = [{transform_indices = @transform_0, window_bounds = array<i64: 2, 128>}, {transform_indices = @transform_1, window_bounds = array<i64: 128, 128>}, {transform_indices = @transform_2, window_bounds = array<i64: 1, 128>}, {transform_indices = @transform_3, window_bounds = array<i64: 1, 2, 128>}]} {
    %c0_i32 = arith.constant 0 : i32
    %0 = arith.cmpi eq, %arg2, %c0_i32 : i32
    %1 = arith.extui %0 : i1 to i32
    %c0_i32_0 = arith.constant 0 : i32
    %2 = arith.cmpi ne, %1, %c0_i32_0 : i32
    scf.if %2 {
      %cst_11 = arith.constant 0.000000e+00 : f32
      %18 = vector.broadcast %cst_11 : f32 to vector<2x128xf32>
      %c0_12 = arith.constant 0 : index
      %c0_13 = arith.constant 0 : index
      %19 = vector.load %arg7[%c0_12, %c0_13] : memref<2x128xf32, #tpu.memory_space<vmem>>, vector<2x128xf32>
      tpu.vector_store %arg7[%c0_12, %c0_13], %18 {strides = array<i32>} : memref<2x128xf32, #tpu.memory_space<vmem>>, vector<2x128xf32>,
    } else {
    }
    %c0 = arith.constant 0 : index
    %c0_1 = arith.constant 0 : index
    %3 = vector.load %arg3[%c0, %c0_1] : memref<2x128xf32, #tpu.memory_space<vmem>>, vector<2x128xf32>
    %4 = arith.negf %3 : vector<2x128xf32>
    %5 = math.exp %4 : vector<2x128xf32>
    %cst = arith.constant 1.000000e+00 : f32
    %6 = vector.broadcast %cst : f32 to vector<2x128xf32>
    %7 = arith.addf %6, %5 : vector<2x128xf32>
    %8 = arith.divf %6, %7 : vector<2x128xf32>
    %9 = arith.mulf %3, %8 : vector<2x128xf32>
    %c0_2 = arith.constant 0 : index
    %c0_3 = arith.constant 0 : index
    %10 = vector.load %arg7[%c0_2, %c0_3] : memref<2x128xf32, #tpu.memory_space<vmem>>, vector<2x128xf32>
    %c0_4 = arith.constant 0 : index
    %c0_5 = arith.constant 0 : index
    %11 = vector.load %arg4[%c0_4, %c0_5] : memref<128x128xf32, #tpu.memory_space<vmem>>, vector<128x128xf32>
    %cst_6 = arith.constant dense<0.000000e+00> : vector<2x128xf32>
    %12 = tpu.matmul %9, %11, %cst_6 {dimension_numbers = #tpu.dot_dimension_numbers<[1], [0], [0], [1], [0, 0, 1, 1], [], []>} : vector<2x128xf32>, vector<128x128xf32>, vector<2x128xf32> -> vector<2x128xf32>
    %13 = arith.addf %10, %12 : vector<2x128xf32>
    %c0_7 = arith.constant 0 : index
    %c0_8 = arith.constant 0 : index
    %14 = vector.load %arg7[%c0_7, %c0_8] : memref<2x128xf32, #tpu.memory_space<vmem>>, vector<2x128xf32>
    tpu.vector_store %arg7[%c0_7, %c0_8], %13 {strides = array<i32>} : memref<2x128xf32, #tpu.memory_space<vmem>>, vector<2x128xf32>,
    %c0_i32_9 = arith.constant 0 : i32
    %15 = arith.cmpi eq, %arg2, %c0_i32_9 : i32
    %16 = arith.extui %15 : i1 to i32
    %c0_i32_10 = arith.constant 0 : i32
    %17 = arith.cmpi ne, %16, %c0_i32_10 : i32
    scf.if %17 {
      %c0_11 = arith.constant 0 : index
      %c0_12 = arith.constant 0 : index
      %18 = vector.load %arg7[%c0_11, %c0_12] : memref<2x128xf32, #tpu.memory_space<vmem>>, vector<2x128xf32>
      %c0_13 = arith.constant 0 : index
      %c0_14 = arith.constant 0 : index
      %19 = vector.load %arg5[%c0_13, %c0_14] : memref<1x128xf32, #tpu.memory_space<vmem>>, vector<1x128xf32>
      %20 = vector.broadcast %19 : vector<1x128xf32> to vector<2x128xf32>
      %21 = arith.addf %18, %20 : vector<2x128xf32>
      %22 = vector.shape_cast %21 : vector<2x128xf32> to vector<1x2x128xf32>
      %c0_15 = arith.constant 0 : index
      %c0_16 = arith.constant 0 : index
      %c0_17 = arith.constant 0 : index
      %23 = vector.load %arg6[%c0_15, %c0_16, %c0_17] : memref<1x2x128xf32, #tpu.memory_space<vmem>>, vector<1x2x128xf32>
      tpu.vector_store %arg6[%c0_15, %c0_16, %c0_17], %22 {strides = array<i32>} : memref<1x2x128xf32, #tpu.memory_space<vmem>>, vector<1x2x128xf32>,
    } else {
    }
    return
  }
  func.func @transform_0(%arg0: i32, %arg1: i32, %arg2: i32) -> (i32, i32) {
    %c0_i32 = arith.constant 0 : i32
    %c0_i32_0 = arith.constant 0 : i32
    return %c0_i32, %arg2 : i32, i32
  }
  func.func @transform_1(%arg0: i32, %arg1: i32, %arg2: i32) -> (i32, i32) {
    %c1_i32 = arith.constant 1 : i32
    %0 = arith.muli %arg0, %c1_i32 : i32
    %1 = arith.addi %0, %arg1 : i32
    %c0_i32 = arith.constant 0 : i32
    return %arg2, %1 : i32, i32
  }
  func.func @transform_2(%arg0: i32, %arg1: i32, %arg2: i32) -> (i32, i32) {
    %c1_i32 = arith.constant 1 : i32
    %0 = arith.muli %arg0, %c1_i32 : i32
    %1 = arith.addi %0, %arg1 : i32
    %c0_i32 = arith.constant 0 : i32
    %c0_i32_0 = arith.constant 0 : i32
    return %c0_i32, %1 : i32, i32
  }
  func.func @transform_3(%arg0: i32, %arg1: i32, %arg2: i32) -> (i32, i32, i32) {
    %c0_i32 = arith.constant 0 : i32
    %c0_i32_0 = arith.constant 0 : i32
    return %arg0, %c0_i32, %arg1 : i32, i32, i32
  }
}

</mosaic_0001>

<llo_original>
// kernel: tpu_custom_call.1
$region0: #{tpu_custom_call.1}
  #allocation0 [shape = 'u32[]', space=smem, size = 0x4, offset = 0x4, fixed_abs, tag = 'smem constant byte address 0x4 - core index']
  #allocation1 [shape = 'u32[144,128]{1,0:T(1,128)}', space=vmem, size = 0x12000, scoped, tag = 'internal scratch']
  #allocation2 [shape = 'f32[2,128]{1,0:T(2,128)}', space=vmem, size = 0x400, scoped, tag = 'scratch operand']
  %s0 = inlined_call_operand.hbm [shape: f32[2,128], index: 0, kind: input, shape index: {}]
  %s1 = inlined_call_operand.hbm [shape: f32[128,768], index: 1, kind: input, shape index: {}]
  %s2 = inlined_call_operand.vmem [shape: f32[1,768], index: 2, kind: input, shape index: {}]
  %s3 = inlined_call_operand.hbm [shape: f32[6,2,128], index: 3, kind: output, shape index: {}]
  %s4 = sld [smem:[#allocation0]]
  $region61: #{tpu_custom_call.1} parent=0
    _
  %s6 = ssub.s32 1, %s4
  %s7 = scalar_select 0, %s6, %s4
  $region1: #{tpu_custom_call.1} parent=0
    #allocation3 [shape = 'u8[1024]{0}', space=vmem, size = 0x400, scoped, tag = 'input window, operand 0, single buffered']
    #allocation4 [shape = 's32[2]{0}', space=sflag, size = 0x8, scoped, tag = 'scoped memory for tpu_custom_call.1']
    #allocation5 [shape = 's32[2]{0}', space=sflag, size = 0x8, scoped, tag = 'scoped memory for tpu_custom_call.1']
    #allocation6 [shape = 'u8[131072]{0}', space=vmem, size = 0x20000, scoped, tag = 'input window, operand 1']
    #allocation7 [shape = 's32[2]{0}', space=sflag, size = 0x8, scoped, tag = 'scoped memory for tpu_custom_call.1']
    #allocation8 [shape = 'u8[2048]{0}', space=vmem, size = 0x800, scoped, tag = 'output window, operand 0']
    %8 = vsyncpa [#allocation4], 0
    %9 = vsyncpa [#allocation7], 0
    %s10 = scalar_lea.sflag [#allocation7], 1
    %11 = vsyncpa %s10, 0
    %12 = vsyncpa [#allocation5], 0
    %s13 = scalar_lea.sflag [#allocation5], 1
    %14 = vsyncpa %s13, 0
    loop: start=0, step=1, limit=8
    $region2: #{tpu_custom_call.1} parent=1 // loop_pre_header
      _
    $region3: #{tpu_custom_call.1} parent=1 // loop_header
      %s16 = sphi 0, %s20
      %p17 = scmp.ge.s32.totalorder %s16, 8
      %s23 = sphi 0, %s42
      %s24 = sphi 0, %s38
      %s25 = sphi 0, %s34
      %s26 = sphi 0, %s23
      %s27 = sphi 0, %s24
      %s28 = sphi 0, %s25
      %s29 = sphi 0, %s26
      %s30 = sphi 0, %s27
      %s31 = sphi 0, %s28
      %s45 = sphi 0, %s47
      %s48 = sphi 0, %s45
      %s49 = sphi 0, %s48
      %s65 = sphi 0, %s49
      %s75 = sphi 0, %s77
      %s78 = sphi 0, %s75
      %s79 = sphi 0, %s78
      %s95 = sphi 0, %s79
      %s103 = sphi 0, %s105
      %s106 = sphi 0, %s103
      %s107 = sphi 0, %s106
      %s123 = sphi 0, %s107
      %s131 = sphi 0, %s133
      %s134 = sphi 0, %s131
      %s135 = sphi 0, %s134
      %s151 = sphi 0, %s135
    $region4: #{tpu_custom_call.1} parent=1 // loop_header_branch
      %19 = sbr.rel (%p17) target = $region8
    $region5: #{tpu_custom_call.1} parent=1 // loop_body
      %s21 = ssub.s32 %s16, 1
      %s22 = ssub.s32 %s16, 2
      %s32 = sadd.s32 1, %s25
      %p33 = scmp.ge.s32.totalorder %s32, 1
      %s34 = scalar_select %p33, 0, %s32
      %s35 = sadd.s32 1, %s24
      %s36 = scalar_select %p33, %s35, %s24
      %p37 = scmp.ge.s32.totalorder %s36, 1
      %s38 = scalar_select %p37, 0, %s36
      %s39 = sadd.s32 1, %s23
      %s40 = scalar_select %p37, %s39, %s23
      %p41 = scmp.ge.s32.totalorder %s40, 6
      %s42 = scalar_select %p41, 0, %s40
      %s43 = ssub.s32 %s25, %s34
      %p44 = scmp.eq.s32.totalorder %s43, 0
      %s46 = sadd.s32 %s45, 1
      %s47 = scalar_select %p44, %s45, %s46
      %p50 = pneg %p44
      %p51 = scmp.eq.s32.totalorder %s16, 5
      %p52 = por %p50, %p51
      %p53 = scmp.ne.s32.totalorder %s45, %s48
      %p54 = scmp.eq.s32.totalorder %s16, 0
      %p55 = por %p53, %p54
      %p56 = scmp.ne.s32.totalorder %s45, %s48
      %p57 = scmp.eq.s32.totalorder %s21, 5
      %p58 = por %p56, %p57
      %p59 = scmp.ne.s32.totalorder %s48, %s49
      %p60 = scmp.eq.s32.totalorder %s21, 0
      %p61 = por %p59, %p60
      %p62 = scmp.ne.s32.totalorder %s48, %s49
      %p63 = scmp.eq.s32.totalorder %s22, 5
      %p64 = por %p62, %p63
      %p66 = scmp.ne.s32.totalorder %s49, %s65
      %p67 = scmp.eq.s32.totalorder %s22, 0
      %p68 = por %p66, %p67
      %s69 = sadd.s32 %s23, %s24
      %s70 = sadd.s32 %s42, %s38
      %s71 = ssub.s32 %s25, %s34
      %s72 = ssub.s32 %s69, %s70
      %s73 = sor.u32 %s71, %s72
      %p74 = scmp.eq.s32.totalorder %s73, 0
      %s76 = sadd.s32 %s75, 1
      %s77 = scalar_select %p74, %s75, %s76
      %p80 = pneg %p74
      %p81 = scmp.eq.s32.totalorder %s16, 5
      %p82 = por %p80, %p81
      %p83 = scmp.ne.s32.totalorder %s75, %s78
      %p84 = scmp.eq.s32.totalorder %s16, 0
      %p85 = por %p83, %p84
      %p86 = scmp.ne.s32.totalorder %s75, %s78
      %p87 = scmp.eq.s32.totalorder %s21, 5
      %p88 = por %p86, %p87
      %p89 = scmp.ne.s32.totalorder %s78, %s79
      %p90 = scmp.eq.s32.totalorder %s21, 0
      %p91 = por %p89, %p90
      %p92 = scmp.ne.s32.totalorder %s78, %s79
      %p93 = scmp.eq.s32.totalorder %s22, 5
      %p94 = por %p92, %p93
      %p96 = scmp.ne.s32.totalorder %s79, %s95
      %p97 = scmp.eq.s32.totalorder %s22, 0
      %p98 = por %p96, %p97
      %s99 = sadd.s32 %s23, %s24
      %s100 = sadd.s32 %s42, %s38
      %s101 = ssub.s32 %s99, %s100
      %p102 = scmp.eq.s32.totalorder %s101, 0
      %s104 = sadd.s32 %s103, 1
      %s105 = scalar_select %p102, %s103, %s104
      %p108 = pneg %p102
      %p109 = scmp.eq.s32.totalorder %s16, 5
      %p110 = por %p108, %p109
      %p111 = scmp.ne.s32.totalorder %s103, %s106
      %p112 = scmp.eq.s32.totalorder %s16, 0
      %p113 = por %p111, %p112
      %p114 = scmp.ne.s32.totalorder %s103, %s106
      %p115 = scmp.eq.s32.totalorder %s21, 5
      %p116 = por %p114, %p115
      %p117 = scmp.ne.s32.totalorder %s106, %s107
      %p118 = scmp.eq.s32.totalorder %s21, 0
      %p119 = por %p117, %p118
      %p120 = scmp.ne.s32.totalorder %s106, %s107
      %p121 = scmp.eq.s32.totalorder %s22, 5
      %p122 = por %p120, %p121
      %p124 = scmp.ne.s32.totalorder %s107, %s123
      %p125 = scmp.eq.s32.totalorder %s22, 0
      %p126 = por %p124, %p125
      %s127 = ssub.s32 %s23, %s42
      %s128 = ssub.s32 %s24, %s38
      %s129 = sor.u32 %s127, %s128
      %p130 = scmp.eq.s32.totalorder %s129, 0
      %s132 = sadd.s32 %s131, 1
      %s133 = scalar_select %p130, %s131, %s132
      %p136 = pneg %p130
      %p137 = scmp.eq.s32.totalorder %s16, 5
      %p138 = por %p136, %p137
      %p139 = scmp.ne.s32.totalorder %s131, %s134
      %p140 = scmp.eq.s32.totalorder %s16, 0
      %p141 = por %p139, %p140
      %p142 = scmp.ne.s32.totalorder %s131, %s134
      %p143 = scmp.eq.s32.totalorder %s21, 5
      %p144 = por %p142, %p143
      %p145 = scmp.ne.s32.totalorder %s134, %s135
      %p146 = scmp.eq.s32.totalorder %s21, 0
      %p147 = por %p145, %p146
      %p148 = scmp.ne.s32.totalorder %s134, %s135
      %p149 = scmp.eq.s32.totalorder %s22, 5
      %p150 = por %p148, %p149
      %p152 = scmp.ne.s32.totalorder %s135, %s151
      %p153 = scmp.eq.s32.totalorder %s22, 0
      %p154 = por %p152, %p153
      %p155 = scmp.le.s32.totalorder 1, %s16
      %p156 = scmp.lt.s32.totalorder %s16, 7
      %p157 = pnand %p155, %p156
      %p158 = pneg %p157
      // Predicated region
      $region9: #{tpu_custom_call.1} parent=5 // pred_check
        _
      $region10: #{tpu_custom_call.1} parent=5 // pred_check_branch
        %160 = sbr.rel (%p157) target = $region12
      $region11: #{tpu_custom_call.1} parent=5 // pred_region
        %s161 = ssub.s32 %s16, 1
        // Predicated region
        $region13: #{tpu_custom_call.1} parent=11 // pred_check
          %p162 = pneg %p61
        $region14: #{tpu_custom_call.1} parent=11 // pred_check_branch
          %164 = sbr.rel (%p162) target = $region16
        $region15: #{tpu_custom_call.1} parent=11 // pred_region
          %s166 = ssub.s32 32, 32
          %167 = vsyncadd [#allocation4], %s166
          %s168 = smul.addr %s28, 32
          %s169 = scalar_lea.hbm %s0, %s168
          %s171 = sshll.u32 [#allocation3], 4
          %s172 = int_to_ptr.vmem [resolvable:$true] %s171
          %174 = dma.hbm_to_vmem [thread:$0]  %s169, 32, %s172, [#allocation4]
        $region16: #{tpu_custom_call.1} parent=11 // pred_fallthru
          _
      $region12: #{tpu_custom_call.1} parent=5 // pred_fallthru
        _
      %p175 = scmp.lt.s32.totalorder %s16, 6
      // Predicated region
      $region17: #{tpu_custom_call.1} parent=5 // pred_check
        %p176 = pneg %p175
      $region18: #{tpu_custom_call.1} parent=5 // pred_check_branch
        %178 = sbr.rel (%p176) target = $region20
      $region19: #{tpu_custom_call.1} parent=5 // pred_region
        // Predicated region
        $region21: #{tpu_custom_call.1} parent=19 // pred_check
          %p179 = pneg %p85
        $region22: #{tpu_custom_call.1} parent=19 // pred_check_branch
          %181 = sbr.rel (%p179) target = $region24
        $region23: #{tpu_custom_call.1} parent=19 // pred_region
          %s182 = sand.u32 %s75, 1
          %s183 = scalar_lea.sflag [#allocation7], %s182
          %s184 = sand.u32 %s75, 1
          %s185 = smul.addr %s184, 128
          %s186 = scalar_lea.vmem [#allocation6], %s185
          %s187 = sadd.s32 %s23, %s24
          %s188 = smul.u32 16, %s25
          %s190 = ssub.s32 2048, 2048
          %191 = vsyncadd %s183, %s190
          %s192 = smul.addr %s188, 6
          %s193 = sadd.s32 %s187, %s192
          %s194 = smul.addr %s193, 128
          %s195 = scalar_lea.hbm %s1, %s194
          %s196 = sshll.u32 %s186, 4
          %s197 = int_to_ptr.vmem [resolvable:$true] %s196
          %202 = dma.hbm_to_vmem [thread:$0]  %s195, 2048, %s197, %s183, 768, 128, 8
        $region24: #{tpu_custom_call.1} parent=19 // pred_fallthru
          _
        // Predicated region
        $region25: #{tpu_custom_call.1} parent=19 // pred_check
          %p203 = pneg %p113
        $region26: #{tpu_custom_call.1} parent=19 // pred_check_branch
          %205 = sbr.rel (%p203) target = $region28
        $region27: #{tpu_custom_call.1} parent=19 // pred_region
          %s206 = sadd.s32 %s23, %s24
          %p207 = scmp.lt.s32.totalorder %s206, 5
          %s208 = scalar_select %p207, %s206, 5
          %s209 = scalar_lea.vmem %s2, %s208
          %s210 = sadd.s32 %s23, %s24
        $region28: #{tpu_custom_call.1} parent=19 // pred_fallthru
          _
      $region20: #{tpu_custom_call.1} parent=5 // pred_fallthru
        _
      %p211 = scmp.le.s32.totalorder 1, %s16
      %p212 = scmp.lt.s32.totalorder %s16, 7
      %p213 = pnand %p211, %p212
      %p214 = pneg %p213
      // Predicated region
      $region29: #{tpu_custom_call.1} parent=5 // pred_check
        _
      $region30: #{tpu_custom_call.1} parent=5 // pred_check_branch
        %216 = sbr.rel (%p213) target = $region32
      $region31: #{tpu_custom_call.1} parent=5 // pred_region
        %s217 = ssub.s32 %s16, 1
        // Predicated region
        $region33: #{tpu_custom_call.1} parent=31 // pred_check
          %p218 = pneg %p61
        $region34: #{tpu_custom_call.1} parent=31 // pred_check_branch
          %220 = sbr.rel (%p218) target = $region36
        $region35: #{tpu_custom_call.1} parent=31 // pred_region
          %221 = dma.done [#allocation4], 32
        $region36: #{tpu_custom_call.1} parent=31 // pred_fallthru
          _
        %s222 = sand.u32 %s78, 1
        %s223 = scalar_lea.sflag [#allocation7], %s222
        %s224 = sand.u32 %s78, 1
        %s225 = smul.addr %s224, 128
        %s226 = scalar_lea.vmem [#allocation6], %s225
        // Predicated region
        $region37: #{tpu_custom_call.1} parent=31 // pred_check
          %p227 = pneg %p91
        $region38: #{tpu_custom_call.1} parent=31 // pred_check_branch
          %229 = sbr.rel (%p227) target = $region40
        $region39: #{tpu_custom_call.1} parent=31 // pred_region
          %230 = dma.done %s223, 2048
        $region40: #{tpu_custom_call.1} parent=31 // pred_fallthru
          _
        %p231 = pneg %p61
        %p232 = pneg %p58
        %s233 = sand.u32 %s78, 1
        %s234 = scalar_lea.sflag [#allocation7], %s233
        %s235 = sand.u32 %s78, 1
        %s236 = smul.addr %s235, 128
        %s237 = scalar_lea.vmem [#allocation6], %s236
        %p238 = pneg %p91
        %p239 = pneg %p88
        %s240 = sadd.s32 %s26, %s27
        %p241 = scmp.lt.s32.totalorder %s240, 5
        %s242 = scalar_select %p241, %s240, 5
        %s243 = scalar_lea.vmem %s2, %s242
        %p244 = pneg %p119
        %p245 = pneg %p116
        %p246 = pneg %p147
        %p247 = pneg %p144
        %s248 = sand.u32 %s134, 1
        %s249 = scalar_lea.sflag [#allocation5], %s248
        %s250 = sand.u32 %s134, 1
        %s251 = smul.addr %s250, 2
        %s252 = scalar_lea.vmem [#allocation8], %s251
        %s253 = sadd.s32 %s26, %s27
        %s254 = smul.u32 16, %s28
        %s255 = sadd.s32 %s26, %s27
        %p256 = scmp.lt.s32.totalorder %s255, 5
        %s257 = scalar_select %p256, %s255, 5
        %s258 = scalar_lea.vmem %s2, %s257
        %s259 = sadd.s32 %s26, %s27
        %p260 = scmp.eq.s32.totalorder %s28, 0
        // Predicated region
        $region41: #{tpu_custom_call.1} parent=31 // pred_check
          %p261 = pneg %p260
        $region42: #{tpu_custom_call.1} parent=31 // pred_check_branch
          %263 = sbr.rel (%p261) target = $region44
        $region43: #{tpu_custom_call.1} parent=31 // pred_region
          %264 = vst [vmem:[#allocation2] sm:$0x3] 0.0
        $region44: #{tpu_custom_call.1} parent=31 // pred_fallthru
          _
        %v265 = vld [vmem:[#allocation3] sm:$0x3]
        %v266 = vxor.u32 %v265, 2147483648
        %v267 = vmul.f32 %v266, 1.442695
        %v268 = vpow.pop %v267
        %v269 = vadd.f32 %v268, 1.0
        %v270 = vrcp.pop %v269
        %v271 = vmul.f32 1.0, %v270
        %v272 = vmul.f32 %v265, %v271
        %v273 = vld [vmem:[#allocation2] sm:$0x3]
        %v274 = vld [vmem:[%s226] sm:$0xff]
        %v275 = vld [vmem:[%s226 + $0x8] sm:$0xff]
        %v276 = vld [vmem:[%s226 + $0x10] sm:$0xff]
        %v277 = vld [vmem:[%s226 + $0x18] sm:$0xff]
        %v278 = vld [vmem:[%s226 + $0x20] sm:$0xff]
        %v279 = vld [vmem:[%s226 + $0x28] sm:$0xff]
        %v280 = vld [vmem:[%s226 + $0x30] sm:$0xff]
        %v281 = vld [vmem:[%s226 + $0x38] sm:$0xff]
        %v282 = vld [vmem:[%s226 + $0x40] sm:$0xff]
        %v283 = vld [vmem:[%s226 + $0x48] sm:$0xff]
        %v284 = vld [vmem:[%s226 + $0x50] sm:$0xff]
        %v285 = vld [vmem:[%s226 + $0x58] sm:$0xff]
        %v286 = vld [vmem:[%s226 + $0x60] sm:$0xff]
        %v287 = vld [vmem:[%s226 + $0x68] sm:$0xff]
        %v288 = vld [vmem:[%s226 + $0x70] sm:$0xff]
        %v289 = vld [vmem:[%s226 + $0x78] sm:$0xff]
        %290 = vmatprep.subr.mxu0 0.0
        %291 = vmatpush1.msra.mxu0 %v274
        %292 = vmatprep.subr.mxu0 0.0
        %293 = vmatpush1.msra.mxu0 %v275
        %294 = vmatprep.subr.mxu0 0.0
        %295 = vmatpush1.msra.mxu0 %v276
        %296 = vmatprep.subr.mxu0 0.0
        %297 = vmatpush1.msra.mxu0 %v277
        %298 = vmatprep.subr.mxu0 0.0
        %299 = vmatpush1.msra.mxu0 %v278
        %300 = vmatprep.subr.mxu0 0.0
        %301 = vmatpush1.msra.mxu0 %v279
        %302 = vmatprep.subr.mxu0 0.0
        %303 = vmatpush1.msra.mxu0 %v280
        %304 = vmatprep.subr.mxu0 0.0
        %305 = vmatpush1.msra.mxu0 %v281
        %306 = vmatprep.subr.mxu0 0.0
        %307 = vmatpush1.msra.mxu0 %v282
        %308 = vmatprep.subr.mxu0 0.0
        %309 = vmatpush1.msra.mxu0 %v283
        %310 = vmatprep.subr.mxu0 0.0
        %311 = vmatpush1.msra.mxu0 %v284
        %312 = vmatprep.subr.mxu0 0.0
        %313 = vmatpush1.msra.mxu0 %v285
        %314 = vmatprep.subr.mxu0 0.0
        %315 = vmatpush1.msra.mxu0 %v286
        %316 = vmatprep.subr.mxu0 0.0
        %317 = vmatpush1.msra.mxu0 %v287
        %318 = vmatprep.subr.mxu0 0.0
        %319 = vmatpush1.msra.mxu0 %v288
        %320 = vmatprep.subr.mxu0 0.0
        %321 = vmatpush1.msra.mxu0 %v289
        %322 = vmatprep.subr.mxu0 0.0
        %323 = vmatpush1.msra.mxu0 0.0
        %324 = vmatprep.subr.mxu0 0.0
        %325 = vmatpush1.msra.mxu0 0.0
        %326 = vmatprep.subr.mxu0 0.0
        %327 = vmatpush1.msra.mxu0 0.0
        %328 = vmatprep.subr.mxu0 0.0
        %329 = vmatpush1.msra.mxu0 0.0
        %330 = vmatprep.subr.mxu0 0.0
        %331 = vmatpush1.msra.mxu0 0.0
        %332 = vmatprep.subr.mxu0 0.0
        %333 = vmatpush1.msra.mxu0 0.0
        %334 = vmatprep.subr.mxu0 0.0
        %335 = vmatpush1.msra.mxu0 0.0
        %336 = vmatprep.subr.mxu0 0.0
        %337 = vmatpush1.msra.mxu0 0.0
        %338 = vmatprep.subr.mxu0 0.0
        %339 = vmatpush1.msra.mxu0 0.0
        %340 = vmatprep.subr.mxu0 0.0
        %341 = vmatpush1.msra.mxu0 0.0
        %342 = vmatprep.subr.mxu0 0.0
        %343 = vmatpush1.msra.mxu0 0.0
        %344 = vmatprep.subr.mxu0 0.0
        %345 = vmatpush1.msra.mxu0 0.0
        %346 = vmatprep.subr.mxu0 0.0
        %347 = vmatpush1.msra.mxu0 0.0
        %348 = vmatprep.subr.mxu0 0.0
        %349 = vmatpush1.msra.mxu0 0.0
        %350 = vmatprep.subr.mxu0 0.0
        %351 = vmatpush1.msra.mxu0 0.0
        %352 = vmatprep.subr.mxu0 0.0
        %353 = vmatpush1.msra.mxu0 0.0
        %354 = vmatprep.mubr.f32.mxu0 0.0
        %355 = vmatmul.mubr.f32.gmra.mrb[0].mxu0 %v272
        %v356 = vpop.f32.mrb[0].mxu0
        %v357 = vadd.f32 0.0, %v356
        %v358 = vpop.f32.mrb[0].mxu0
        %359 = vdwg.mxu0
        %v360 = vadd.f32 %v273, %v357
        %361 = vst [vmem:[#allocation2] sm:$0x3] %v360
        // Predicated region
        $region45: #{tpu_custom_call.1} parent=31 // pred_check
          %p362 = pneg %p260
        $region46: #{tpu_custom_call.1} parent=31 // pred_check_branch
          %364 = sbr.rel (%p362) target = $region48
        $region47: #{tpu_custom_call.1} parent=31 // pred_region
          %v365 = vld [vmem:[#allocation2] sm:$0x3]
          %v366 = vld [vmem:[%s258] sm:$0x1]
          %v368 = vlaneseq
          %v369 = vshrl.u32 %v368, 7
          %v370 = vsub.s32 0, %v369
          %v371 = vrot.slane %v366, %v370
          %v373 = vadd.f32 %v365, %v371
          %374 = vst [vmem:[%s252] sm:$0x3] %v373
        $region48: #{tpu_custom_call.1} parent=31 // pred_fallthru
          _
        %s375 = sand.u32 %s134, 1
        %s376 = scalar_lea.sflag [#allocation5], %s375
        %s377 = sand.u32 %s134, 1
        %s378 = smul.addr %s377, 2
        %s379 = scalar_lea.vmem [#allocation8], %s378
        // Predicated region
        $region49: #{tpu_custom_call.1} parent=31 // pred_check
          %p380 = pneg %p144
        $region50: #{tpu_custom_call.1} parent=31 // pred_check_branch
          %382 = sbr.rel (%p380) target = $region52
        $region51: #{tpu_custom_call.1} parent=31 // pred_region
          %s384 = ssub.s32 32, 32
          %385 = vsyncadd %s376, %s384
          %s386 = sadd.s32 %s27, %s26
          %s387 = smul.addr %s386, 32
          %s388 = scalar_lea.hbm %s3, %s387
          %s390 = sshll.u32 %s379, 4
          %s391 = int_to_ptr.vmem [resolvable:$true] %s390
          %393 = dma.vmem_to_hbm [thread:$0]  %s391, 32, %s388, %s376
        $region52: #{tpu_custom_call.1} parent=31 // pred_fallthru
          _
      $region32: #{tpu_custom_call.1} parent=5 // pred_fallthru
        _
      %p394 = scmp.le.s32.totalorder 2, %s16
      // Predicated region
      $region53: #{tpu_custom_call.1} parent=5 // pred_check
        %p395 = pneg %p394
      $region54: #{tpu_custom_call.1} parent=5 // pred_check_branch
        %397 = sbr.rel (%p395) target = $region56
      $region55: #{tpu_custom_call.1} parent=5 // pred_region
        %s398 = ssub.s32 %s16, 2
        // Predicated region
        $region57: #{tpu_custom_call.1} parent=55 // pred_check
          %p399 = pneg %p150
        $region58: #{tpu_custom_call.1} parent=55 // pred_check_branch
          %401 = sbr.rel (%p399) target = $region60
        $region59: #{tpu_custom_call.1} parent=55 // pred_region
          %s402 = sand.u32 %s135, 1
          %s403 = scalar_lea.sflag [#allocation5], %s402
          %s404 = sand.u32 %s135, 1
          %s405 = smul.addr %s404, 2
          %s406 = scalar_lea.vmem [#allocation8], %s405
          %407 = dma.done %s403, 32
        $region60: #{tpu_custom_call.1} parent=55 // pred_fallthru
          _
      $region56: #{tpu_custom_call.1} parent=5 // pred_fallthru
        _
    $region6: #{tpu_custom_call.1} parent=1 // loop_footer
      %s20 = sadd.s32 1, %s16
    $region7: #{tpu_custom_call.1} parent=1 // loop_footer_branch
      %15 = sbr.rel target = $region3
    $region8: #{tpu_custom_call.1} parent=1 // loop_exit
      _
    %408 = vsyncpa [#allocation4], 1
    %s409 = scalar_lea.sflag [#allocation4], 1
    %410 = vsyncpa %s409, 1
    %411 = vsyncpa [#allocation7], 1
    %s412 = scalar_lea.sflag [#allocation7], 1
    %413 = vsyncpa %s412, 1
    %414 = vsyncpa [#allocation5], 1
    %s415 = scalar_lea.sflag [#allocation5], 1
    %416 = vsyncpa %s415, 1

</llo_original>
